<compile_context>
chip_gen: v7x
topology: tpu7x:2x2x1
jax: 0.10.0
libtpu: 0.0.40
codegen_flags: <defaults>
</compile_context>

<pallas_src>
import functools

import jax
import jax.numpy as jnp
from jax.experimental import pallas as pl
from jax.experimental.pallas import tpu as pltpu


def _peg_kernel(x_ref, w_ref, b_ref, o_ref, *, kernel_size, use_roll):
    # x_ref: (1, TC, L) activation tile (channels on sublanes, sequence on lanes)
    # w_ref: (TC, K)    f32 depthwise conv taps per channel
    # b_ref: (TC, 1)    f32 bias per channel
    # o_ref: (1, TC, L) output tile (conv + bias + residual), input dtype
    x = x_ref[0].astype(jnp.float32)        # f32 accumulation; VALU slack is free
    tc, L = x.shape
    w = w_ref[...]                          # (TC, K) float32
    bias = b_ref[...]                       # (TC, 1) float32
    pad = kernel_size // 2

    # Centre tap; the residual "+ x" is folded in as (w_center + 1).
    acc = x * (w[:, pad:pad + 1] + 1.0) + bias

    if use_roll:
        lane = jax.lax.broadcasted_iota(jnp.int32, (tc, L), dimension=1)

    for k in range(kernel_size):            # static unroll over remaining taps
        off = k - pad
        if off == 0:
            continue
        if use_roll:
            # XLU rotate + VPU select: no tile-sized concat temporaries.
            # rolled[l] = x[(l + off) mod L]; mask zeros the wrapped halo.
            rolled = pltpu.roll(x, shift=(-off) % L, axis=x.ndim - 1)
            if off < 0:
                valid = lane >= -off         # keep where l + off >= 0
            else:
                valid = lane < (L - off)     # keep where l + off < L
            shifted = jnp.where(valid, rolled, 0.0)
        else:
            # Fallback for ragged (non-128-multiple) lane dims: in-register
            # shifted copy with zero columns entering at the edge.
            if off < 0:
                shifted = jnp.concatenate(
                    [jnp.zeros((tc, -off), x.dtype), x[:, :L + off]], axis=1)
            else:
                shifted = jnp.concatenate(
                    [x[:, off:], jnp.zeros((tc, off), x.dtype)], axis=1)
        acc = acc + shifted * w[:, k:k + 1]

    o_ref[0] = acc.astype(o_ref.dtype)


def _vmem_capacity_bytes():
    try:
        return int(pltpu.get_tpu_info().vmem_capacity_bytes)
    except Exception:
        return 64 * 1024 * 1024             # conservative (v7x per-TC VMEM)


def _sublane_multiple(dtype):
    itemsize = jnp.dtype(dtype).itemsize
    # 8 for 32-bit, 16 for 16-bit, 32 for 8-bit (sub-32-bit packs along sublanes)
    return 8 * max(1, 4 // max(1, itemsize))


def _choose_block_c(C, L, dtype, target_bytes):
    """Channels per block: as many as fit the byte budget, aligned to the
    dtype's sublane-packing multiple.  Last block may be partial (cdiv grid)."""
    itemsize = jnp.dtype(dtype).itemsize
    sub = _sublane_multiple(dtype)
    per_channel = max(1, L * itemsize)
    rows = (target_bytes // per_channel) // sub * sub
    rows = max(sub, rows)
    return C if C <= rows else rows


def peg_forward(x, weight, bias, *, kernel_size=3):
    """x: (B, C, L) exactly like PyTorch Conv1d input (no layout change).
    weight: (C, 1, K) depthwise Conv1d weight.  bias: (C,)."""
    B, C, L = x.shape
    K = kernel_size
    assert K % 2 == 1, "PEG assumes odd kernel_size (padding = kernel_size // 2)"
    itemsize = jnp.dtype(x.dtype).itemsize

    # Tiny parameter reshapes only; activations are never transposed / padded.
    # Params are passed as f32 so the in-kernel accumulation is f32 regardless
    # of activation dtype (matches PyTorch f32 conv accumulation for bf16).
    w_ck = weight[:, 0, :].astype(jnp.float32)        # (C, K)
    b_c1 = bias.reshape(C, 1).astype(jnp.float32)     # (C, 1)

    vmem_cap = _vmem_capacity_bytes()
    # ~4 MiB blocks on v7x (64 MiB VMEM), ~8 MiB on v5e/v6e (128 MiB VMEM).
    target_bytes = max(2 * 1024 * 1024, vmem_cap // 16)
    tc = _choose_block_c(C, L, x.dtype, target_bytes)
    num_c_blocks = pl.cdiv(C, tc)
    # Batch innermost: parameter blocks keep the same block index across
    # consecutive steps, so Pallas does not re-DMA them every grid step.
    grid = (num_c_blocks, B)
    n_steps = num_c_blocks * B

    block_bytes = tc * L * itemsize
    # ~3x in (Buffered(3)) + 2x out + params + slack, clamped under physical VMEM.
    vmem_limit = int(min(0.85 * vmem_cap,
                         max(32 * 1024 * 1024, 8 * block_bytes)))

    x_index = lambda c, b: (b, c, 0)
    if n_steps >= 4:
        # Deeper prefetch on the streamed input when there are enough grid
        # steps for it to matter (hides HBM latency on this mem-bound kernel).
        x_spec = pl.BlockSpec((1, tc, L), x_index, pipeline_mode=pl.Buffered(3))
    else:
        x_spec = pl.BlockSpec((1, tc, L), x_index)

    use_roll = (L % 128 == 0)
    kernel = functools.partial(_peg_kernel, kernel_size=K, use_roll=use_roll)

    # TODO(synk): for real Twins stages where L (49/196/784) is not a multiple
    # of 128, pad L once at the model level so stores stay lane-dense.
    # TODO(synk): for extremely long sequences, tile L with a k//2 halo instead
    # of taking the whole sequence per block.

    return pl.pallas_call(
        kernel,
        out_shape=jax.ShapeDtypeStruct((B, C, L), x.dtype),
        grid_spec=pltpu.PrefetchScalarGridSpec(
            num_scalar_prefetch=0,
            grid=grid,
            in_specs=[
                x_spec,
                pl.BlockSpec((tc, K), lambda c, b: (c, 0)),
                pl.BlockSpec((tc, 1), lambda c, b: (c, 0)),
            ],
            out_specs=pl.BlockSpec((1, tc, L), lambda c, b: (b, c, 0)),
        ),
        compiler_params=pltpu.CompilerParams(
            dimension_semantics=("parallel", "parallel"),
            vmem_limit_bytes=vmem_limit,
        ),
        cost_estimate=pl.CostEstimate(
            flops=(2 * K + 2) * B * C * L,
            transcendentals=0,
            bytes_accessed=2 * B * C * L * itemsize + C * (K + 1) * 4,
        ),
    )(x, w_ck, b_c1)


def peg_reference(x_ncl, weight, bias, *, kernel_size=3):
    """Pure-JAX depthwise Conv1d + residual (f32) for verification."""
    pad = kernel_size // 2
    C = x_ncl.shape[1]
    x32 = x_ncl.astype(jnp.float32)
    w32 = weight.astype(jnp.float32)
    conv = jax.lax.conv_general_dilated(
        x32, w32,
        window_strides=(1,),
        padding=[(pad, pad)],
        dimension_numbers=("NCH", "OIH", "NCH"),
        feature_group_count=C,
    ) + bias.astype(jnp.float32).reshape(1, C, 1)
    return conv + x32


if __name__ == "__main__":
    key = jax.random.PRNGKey(0)

    cases = [
        # (B, C, L, kernel_size, dtype, tol)
        (2, 8, 128, 3, jnp.float32, 1e-5),     # lane-dense L: roll + mask path
        (2, 16, 128, 3, jnp.bfloat16, 5e-2),   # bf16 activations, f32 accumulation
        (2, 8, 16, 5, jnp.float32, 1e-5),      # ragged L: concat fallback path
    ]

    for i, (B, C, L, K, dtype, tol) in enumerate(cases):
        k_x, k_w, k_b, key = jax.random.split(key, 4)
        x = jax.random.normal(k_x, (B, C, L), dtype=jnp.float32)
        # Conv1d(dim, dim, k, groups=dim) -> weight (dim, 1, k), bias (dim,)
        weight = jax.random.normal(k_w, (C, 1, K), dtype=jnp.float32) * 0.1
        bias = jax.random.normal(k_b, (C,), dtype=jnp.float32) * 0.1

        x_d = x.astype(dtype)
        w_d = weight.astype(dtype)
        b_d = bias.astype(dtype)

        out = peg_forward(x_d, w_d, b_d, kernel_size=K)
        out = jax.block_until_ready(out)
        assert out.shape == (B, C, L)
        assert out.dtype == jnp.dtype(dtype)

        ref = peg_reference(x_d.astype(jnp.float32), w_d.astype(jnp.float32),
                            b_d.astype(jnp.float32), kernel_size=K)
        assert jnp.allclose(out.astype(jnp.float32), ref, atol=tol, rtol=tol), \
            f"case {i}: mismatch vs reference"

    print("KERNEL_OK")
</pallas_src>

<mosaic_0001>
module attributes {stable_mosaic.version = 11 : i64} {
  func.func @_peg_kernel(%arg0: i32, %arg1: i32, %arg2: memref<1x8x128xf32, #tpu.memory_space<vmem>>, %arg3: memref<8x3xf32, #tpu.memory_space<vmem>>, %arg4: memref<8x1xf32, #tpu.memory_space<vmem>>, %arg5: memref<1x8x128xf32, #tpu.memory_space<vmem>>) attributes {dimension_semantics = [#tpu.dimension_semantics<parallel>, #tpu.dimension_semantics<parallel>], iteration_bounds = array<i64: 1, 2>, scalar_prefetch = 0 : i64, scratch_operands = 0 : i64, tpu.core_type = #tpu.core_type<tc>, window_params = [{transform_indices = @transform_0, window_bounds = array<i64: 1, 8, 128>}, {transform_indices = @transform_1, window_bounds = array<i64: 8, 3>}, {transform_indices = @transform_2, window_bounds = array<i64: 8, 1>}, {transform_indices = @transform_3, window_bounds = array<i64: 1, 8, 128>}]} {
    %c0 = arith.constant 0 : index
    %c0_0 = arith.constant 0 : index
    %c0_1 = arith.constant 0 : index
    %0 = vector.load %arg2[%c0, %c0_0, %c0_1] : memref<1x8x128xf32, #tpu.memory_space<vmem>>, vector<1x8x128xf32>
    %1 = vector.shape_cast %0 : vector<1x8x128xf32> to vector<8x128xf32>
    %c0_2 = arith.constant 0 : index
    %c0_3 = arith.constant 0 : index
    %2 = vector.load %arg3[%c0_2, %c0_3] : memref<8x3xf32, #tpu.memory_space<vmem>>, vector<8x3xf32>
    %c0_4 = arith.constant 0 : index
    %c0_5 = arith.constant 0 : index
    %3 = vector.load %arg4[%c0_4, %c0_5] : memref<8x1xf32, #tpu.memory_space<vmem>>, vector<8x1xf32>
    %4 = vector.extract_strided_slice %2 {offsets = [0, 1], sizes = [8, 1], strides = [1, 1]} : vector<8x3xf32> to vector<8x1xf32>
    %cst = arith.constant 1.000000e+00 : f32
    %5 = vector.broadcast %cst : f32 to vector<8x1xf32>
    %6 = arith.addf %4, %5 : vector<8x1xf32>
    %7 = vector.broadcast %6 : vector<8x1xf32> to vector<8x128xf32>
    %8 = arith.mulf %1, %7 : vector<8x128xf32>
    %9 = vector.broadcast %3 : vector<8x1xf32> to vector<8x128xf32>
    %10 = arith.addf %8, %9 : vector<8x128xf32>
    %11 = tpu.iota {dimensions = array<i32: 1>} : vector<8x128xi32>
    %c1_i32 = arith.constant 1 : i32
    %12 = tpu.dynamic_rotate %1 by %c1_i32 dim 1 : vector<8x128xf32>, i32 -> vector<8x128xf32>
    %c1_i32_6 = arith.constant 1 : i32
    %13 = vector.broadcast %c1_i32_6 : i32 to vector<8x128xi32>
    %14 = arith.cmpi sge, %11, %13 : vector<8x128xi32>
    %cst_7 = arith.constant 0.000000e+00 : f32
    %15 = vector.broadcast %cst_7 : f32 to vector<8x128xf32>
    %16 = arith.select %14, %12, %15 : vector<8x128xi1>, vector<8x128xf32>
    %17 = vector.extract_strided_slice %2 {offsets = [0, 0], sizes = [8, 1], strides = [1, 1]} : vector<8x3xf32> to vector<8x1xf32>
    %18 = vector.broadcast %17 : vector<8x1xf32> to vector<8x128xf32>
    %19 = arith.mulf %16, %18 : vector<8x128xf32>
    %20 = arith.addf %10, %19 : vector<8x128xf32>
    %c127_i32 = arith.constant 127 : i32
    %21 = tpu.dynamic_rotate %1 by %c127_i32 dim 1 : vector<8x128xf32>, i32 -> vector<8x128xf32>
    %c127_i32_8 = arith.constant 127 : i32
    %22 = vector.broadcast %c127_i32_8 : i32 to vector<8x128xi32>
    %23 = arith.cmpi slt, %11, %22 : vector<8x128xi32>
    %cst_9 = arith.constant 0.000000e+00 : f32
    %24 = vector.broadcast %cst_9 : f32 to vector<8x128xf32>
    %25 = arith.select %23, %21, %24 : vector<8x128xi1>, vector<8x128xf32>
    %26 = vector.extract_strided_slice %2 {offsets = [0, 2], sizes = [8, 1], strides = [1, 1]} : vector<8x3xf32> to vector<8x1xf32>
    %27 = vector.broadcast %26 : vector<8x1xf32> to vector<8x128xf32>
    %28 = arith.mulf %25, %27 : vector<8x128xf32>
    %29 = arith.addf %20, %28 : vector<8x128xf32>
    %c0_10 = arith.constant 0 : index
    %c0_11 = arith.constant 0 : index
    %c0_12 = arith.constant 0 : index
    %30 = vector.load %arg5[%c0_10, %c0_11, %c0_12] : memref<1x8x128xf32, #tpu.memory_space<vmem>>, vector<1x8x128xf32>
    %31 = vector.shape_cast %30 : vector<1x8x128xf32> to vector<8x128xf32>
    %32 = vector.shape_cast %29 : vector<8x128xf32> to vector<1x8x128xf32>
    tpu.vector_store %arg5[%c0_10, %c0_11, %c0_12], %32 {strides = array<i32>} : memref<1x8x128xf32, #tpu.memory_space<vmem>>, vector<1x8x128xf32>,
    return
  }
  func.func @transform_0(%arg0: i32, %arg1: i32) -> (i32, i32, i32) {
    %c0_i32 = arith.constant 0 : i32
    %c0_i32_0 = arith.constant 0 : i32
    return %arg1, %arg0, %c0_i32 : i32, i32, i32
  }
  func.func @transform_1(%arg0: i32, %arg1: i32) -> (i32, i32) {
    %c0_i32 = arith.constant 0 : i32
    %c0_i32_0 = arith.constant 0 : i32
    return %arg0, %c0_i32 : i32, i32
  }
  func.func @transform_2(%arg0: i32, %arg1: i32) -> (i32, i32) {
    %c0_i32 = arith.constant 0 : i32
    %c0_i32_0 = arith.constant 0 : i32
    return %arg0, %c0_i32 : i32, i32
  }
  func.func @transform_3(%arg0: i32, %arg1: i32) -> (i32, i32, i32) {
    %c0_i32 = arith.constant 0 : i32
    %c0_i32_0 = arith.constant 0 : i32
    return %arg1, %arg0, %c0_i32 : i32, i32, i32
  }
}

</mosaic_0001>

<llo_original>
// kernel: tpu_custom_call.1
$region0: #{tpu_custom_call.1}
  #allocation0 [shape = 'u32[]', space=smem, size = 0x4, offset = 0x4, fixed_abs, tag = 'smem constant byte address 0x4 - core index']
  #allocation1 [shape = 'u32[144,128]{1,0:T(1,128)}', space=vmem, size = 0x12000, scoped, tag = 'internal scratch']
  %s0 = inlined_call_operand.vmem [shape: f32[2,8,128], index: 0, kind: input, shape index: {}]
  %s1 = inlined_call_operand.vmem [shape: f32[8,3], index: 1, kind: input, shape index: {}]
  %s2 = inlined_call_operand.vmem [shape: f32[8,1], index: 2, kind: input, shape index: {}]
  %s3 = inlined_call_operand.hbm [shape: f32[2,8,128], index: 3, kind: output, shape index: {}]
  %s4 = sld [smem:[#allocation0]]
  $region45: #{tpu_custom_call.1} parent=0
    _
  %s6 = ssub.s32 1, %s4
  %s7 = scalar_select 0, %s6, %s4
  $region1: #{tpu_custom_call.1} parent=0
    #allocation2 [shape = 'u8[8192]{0}', space=vmem, size = 0x2000, scoped, tag = 'output window, operand 0']
    #allocation3 [shape = 's32[2]{0}', space=sflag, size = 0x8, scoped, tag = 'scoped memory for tpu_custom_call.1']
    %8 = vsyncpa [#allocation3], 0
    %s9 = scalar_lea.sflag [#allocation3], 1
    %10 = vsyncpa %s9, 0
    loop: start=0, step=1, limit=4
    $region2: #{tpu_custom_call.1} parent=1 // loop_pre_header
      _
    $region3: #{tpu_custom_call.1} parent=1 // loop_header
      %s12 = sphi 0, %s16
      %p13 = scmp.ge.s32.totalorder %s12, 4
      %s19 = sphi 0, %s31
      %s20 = sphi 0, %s27
      %s21 = sphi 0, %s19
      %s22 = sphi 0, %s20
      %s23 = sphi 0, %s21
      %s24 = sphi 0, %s22
      %s36 = sphi 0, %s38
      %s39 = sphi 0, %s36
      %s40 = sphi 0, %s39
      %s56 = sphi 0, %s40
      %s62 = sphi 0, %s64
      %s65 = sphi 0, %s62
      %s66 = sphi 0, %s65
      %s82 = sphi 0, %s66
      %s88 = sphi 0, %s90
      %s91 = sphi 0, %s88
      %s92 = sphi 0, %s91
      %s108 = sphi 0, %s92
      %s116 = sphi 0, %s118
      %s119 = sphi 0, %s116
      %s120 = sphi 0, %s119
      %s136 = sphi 0, %s120
    $region4: #{tpu_custom_call.1} parent=1 // loop_header_branch
      %15 = sbr.rel (%p13) target = $region8
    $region5: #{tpu_custom_call.1} parent=1 // loop_body
      %s17 = ssub.s32 %s12, 1
      %s18 = ssub.s32 %s12, 2
      %s25 = sadd.s32 1, %s20
      %p26 = scmp.ge.s32.totalorder %s25, 2
      %s27 = scalar_select %p26, 0, %s25
      %s28 = sadd.s32 1, %s19
      %s29 = scalar_select %p26, %s28, %s19
      %p30 = scmp.ge.s32.totalorder %s29, 1
      %s31 = scalar_select %p30, 0, %s29
      %s32 = ssub.s32 %s20, %s27
      %s33 = ssub.s32 %s19, %s31
      %s34 = sor.u32 %s32, %s33
      %p35 = scmp.eq.s32.totalorder %s34, 0
      %s37 = sadd.s32 %s36, 1
      %s38 = scalar_select %p35, %s36, %s37
      %p41 = pneg %p35
      %p42 = scmp.eq.s32.totalorder %s12, 1
      %p43 = por %p41, %p42
      %p44 = scmp.ne.s32.totalorder %s36, %s39
      %p45 = scmp.eq.s32.totalorder %s12, 0
      %p46 = por %p44, %p45
      %p47 = scmp.ne.s32.totalorder %s36, %s39
      %p48 = scmp.eq.s32.totalorder %s17, 1
      %p49 = por %p47, %p48
      %p50 = scmp.ne.s32.totalorder %s39, %s40
      %p51 = scmp.eq.s32.totalorder %s17, 0
      %p52 = por %p50, %p51
      %p53 = scmp.ne.s32.totalorder %s39, %s40
      %p54 = scmp.eq.s32.totalorder %s18, 1
      %p55 = por %p53, %p54
      %p57 = scmp.ne.s32.totalorder %s40, %s56
      %p58 = scmp.eq.s32.totalorder %s18, 0
      %p59 = por %p57, %p58
      %s60 = ssub.s32 %s19, %s31
      %p61 = scmp.eq.s32.totalorder %s60, 0
      %s63 = sadd.s32 %s62, 1
      %s64 = scalar_select %p61, %s62, %s63
      %p67 = pneg %p61
      %p68 = scmp.eq.s32.totalorder %s12, 1
      %p69 = por %p67, %p68
      %p70 = scmp.ne.s32.totalorder %s62, %s65
      %p71 = scmp.eq.s32.totalorder %s12, 0
      %p72 = por %p70, %p71
      %p73 = scmp.ne.s32.totalorder %s62, %s65
      %p74 = scmp.eq.s32.totalorder %s17, 1
      %p75 = por %p73, %p74
      %p76 = scmp.ne.s32.totalorder %s65, %s66
      %p77 = scmp.eq.s32.totalorder %s17, 0
      %p78 = por %p76, %p77
      %p79 = scmp.ne.s32.totalorder %s65, %s66
      %p80 = scmp.eq.s32.totalorder %s18, 1
      %p81 = por %p79, %p80
      %p83 = scmp.ne.s32.totalorder %s66, %s82
      %p84 = scmp.eq.s32.totalorder %s18, 0
      %p85 = por %p83, %p84
      %s86 = ssub.s32 %s19, %s31
      %p87 = scmp.eq.s32.totalorder %s86, 0
      %s89 = sadd.s32 %s88, 1
      %s90 = scalar_select %p87, %s88, %s89
      %p93 = pneg %p87
      %p94 = scmp.eq.s32.totalorder %s12, 1
      %p95 = por %p93, %p94
      %p96 = scmp.ne.s32.totalorder %s88, %s91
      %p97 = scmp.eq.s32.totalorder %s12, 0
      %p98 = por %p96, %p97
      %p99 = scmp.ne.s32.totalorder %s88, %s91
      %p100 = scmp.eq.s32.totalorder %s17, 1
      %p101 = por %p99, %p100
      %p102 = scmp.ne.s32.totalorder %s91, %s92
      %p103 = scmp.eq.s32.totalorder %s17, 0
      %p104 = por %p102, %p103
      %p105 = scmp.ne.s32.totalorder %s91, %s92
      %p106 = scmp.eq.s32.totalorder %s18, 1
      %p107 = por %p105, %p106
      %p109 = scmp.ne.s32.totalorder %s92, %s108
      %p110 = scmp.eq.s32.totalorder %s18, 0
      %p111 = por %p109, %p110
      %s112 = ssub.s32 %s20, %s27
      %s113 = ssub.s32 %s19, %s31
      %s114 = sor.u32 %s112, %s113
      %p115 = scmp.eq.s32.totalorder %s114, 0
      %s117 = sadd.s32 %s116, 1
      %s118 = scalar_select %p115, %s116, %s117
      %p121 = pneg %p115
      %p122 = scmp.eq.s32.totalorder %s12, 1
      %p123 = por %p121, %p122
      %p124 = scmp.ne.s32.totalorder %s116, %s119
      %p125 = scmp.eq.s32.totalorder %s12, 0
      %p126 = por %p124, %p125
      %p127 = scmp.ne.s32.totalorder %s116, %s119
      %p128 = scmp.eq.s32.totalorder %s17, 1
      %p129 = por %p127, %p128
      %p130 = scmp.ne.s32.totalorder %s119, %s120
      %p131 = scmp.eq.s32.totalorder %s17, 0
      %p132 = por %p130, %p131
      %p133 = scmp.ne.s32.totalorder %s119, %s120
      %p134 = scmp.eq.s32.totalorder %s18, 1
      %p135 = por %p133, %p134
      %p137 = scmp.ne.s32.totalorder %s120, %s136
      %p138 = scmp.eq.s32.totalorder %s18, 0
      %p139 = por %p137, %p138
      %p140 = scmp.le.s32.totalorder 1, %s12
      %p141 = scmp.lt.s32.totalorder %s12, 3
      %p142 = pnand %p140, %p141
      %p143 = pneg %p142
      // Predicated region
      $region9: #{tpu_custom_call.1} parent=5 // pred_check
        _
      $region10: #{tpu_custom_call.1} parent=5 // pred_check_branch
        %145 = sbr.rel (%p142) target = $region12
      $region11: #{tpu_custom_call.1} parent=5 // pred_region
        %s146 = ssub.s32 %s12, 1
        // Predicated region
        $region13: #{tpu_custom_call.1} parent=11 // pred_check
          %p147 = pneg %p78
        $region14: #{tpu_custom_call.1} parent=11 // pred_check_branch
          %149 = sbr.rel (%p147) target = $region16
        $region15: #{tpu_custom_call.1} parent=11 // pred_region
          %p150 = scmp.lt.s32.totalorder %s21, 0
          %s151 = scalar_select %p150, %s21, 0
          %s152 = smul.addr %s151, 8
          %s153 = scalar_lea.vmem %s1, %s152
        $region16: #{tpu_custom_call.1} parent=11 // pred_fallthru
          _
        // Predicated region
        $region17: #{tpu_custom_call.1} parent=11 // pred_check
          %p154 = pneg %p104
        $region18: #{tpu_custom_call.1} parent=11 // pred_check_branch
          %156 = sbr.rel (%p154) target = $region20
        $region19: #{tpu_custom_call.1} parent=11 // pred_region
          %p157 = scmp.lt.s32.totalorder %s21, 0
          %s158 = scalar_select %p157, %s21, 0
          %s159 = smul.addr %s158, 8
          %s160 = scalar_lea.vmem %s2, %s159
        $region20: #{tpu_custom_call.1} parent=11 // pred_fallthru
          _
      $region12: #{tpu_custom_call.1} parent=5 // pred_fallthru
        _
      %p161 = scmp.lt.s32.totalorder %s12, 2
      // Predicated region
      $region21: #{tpu_custom_call.1} parent=5 // pred_check
        %p162 = pneg %p161
      $region22: #{tpu_custom_call.1} parent=5 // pred_check_branch
        %164 = sbr.rel (%p162) target = $region24
      $region23: #{tpu_custom_call.1} parent=5 // pred_region
        // Predicated region
        $region25: #{tpu_custom_call.1} parent=23 // pred_check
          %p165 = pneg %p46
        $region26: #{tpu_custom_call.1} parent=23 // pred_check_branch
          %167 = sbr.rel (%p165) target = $region28
        $region27: #{tpu_custom_call.1} parent=23 // pred_region
          %p168 = scmp.lt.s32.totalorder %s20, 1
          %s169 = scalar_select %p168, %s20, 1
          %p170 = scmp.lt.s32.totalorder %s19, 0
          %s171 = scalar_select %p170, %s19, 0
          %s172 = sadd.s32 %s171, %s169
          %s173 = smul.addr %s172, 8
          %s174 = scalar_lea.vmem %s0, %s173
        $region28: #{tpu_custom_call.1} parent=23 // pred_fallthru
          _
      $region24: #{tpu_custom_call.1} parent=5 // pred_fallthru
        _
      %p175 = scmp.le.s32.totalorder 1, %s12
      %p176 = scmp.lt.s32.totalorder %s12, 3
      %p177 = pnand %p175, %p176
      %p178 = pneg %p177
      // Predicated region
      $region29: #{tpu_custom_call.1} parent=5 // pred_check
        _
      $region30: #{tpu_custom_call.1} parent=5 // pred_check_branch
        %180 = sbr.rel (%p177) target = $region32
      $region31: #{tpu_custom_call.1} parent=5 // pred_region
        %s181 = ssub.s32 %s12, 1
        %p182 = scmp.lt.s32.totalorder %s22, 1
        %s183 = scalar_select %p182, %s22, 1
        %p184 = scmp.lt.s32.totalorder %s21, 0
        %s185 = scalar_select %p184, %s21, 0
        %s186 = sadd.s32 %s185, %s183
        %s187 = smul.addr %s186, 8
        %s188 = scalar_lea.vmem %s0, %s187
        %p189 = pneg %p52
        %p190 = pneg %p49
        %p191 = scmp.lt.s32.totalorder %s21, 0
        %s192 = scalar_select %p191, %s21, 0
        %s193 = smul.addr %s192, 8
        %s194 = scalar_lea.vmem %s1, %s193
        %p195 = pneg %p78
        %p196 = pneg %p75
        %p197 = scmp.lt.s32.totalorder %s21, 0
        %s198 = scalar_select %p197, %s21, 0
        %s199 = smul.addr %s198, 8
        %s200 = scalar_lea.vmem %s2, %s199
        %p201 = pneg %p104
        %p202 = pneg %p101
        %p203 = pneg %p132
        %p204 = pneg %p129
        %s205 = sand.u32 %s119, 1
        %s206 = scalar_lea.sflag [#allocation3], %s205
        %s207 = sand.u32 %s119, 1
        %s208 = smul.addr %s207, 8
        %s209 = scalar_lea.vmem [#allocation2], %s208
        %p210 = scmp.lt.s32.totalorder %s22, 1
        %s211 = scalar_select %p210, %s22, 1
        %p212 = scmp.lt.s32.totalorder %s21, 0
        %s213 = scalar_select %p212, %s21, 0
        %s214 = sadd.s32 %s213, %s211
        %s215 = smul.addr %s214, 8
        %s216 = scalar_lea.vmem %s0, %s215
        %p217 = scmp.lt.s32.totalorder %s21, 0
        %s218 = scalar_select %p217, %s21, 0
        %s219 = smul.addr %s218, 8
        %s220 = scalar_lea.vmem %s1, %s219
        %p221 = scmp.lt.s32.totalorder %s21, 0
        %s222 = scalar_select %p221, %s21, 0
        %s223 = smul.addr %s222, 8
        %s224 = scalar_lea.vmem %s2, %s223
        %v225 = vld [vmem:[%s216] sm:$0xff]
        %v226 = vld [vmem:[%s220] sm:$0xff]
        %v227 = vld [vmem:[%s224] sm:$0xff]
        %v228 = vadd.f32 %v226, 1.0
        %230 = vset.pattern.permute.xlu0 1
        %231 = vperm.xlu0 %230, %v228
        %v232 = vpop.permute.xlu0 %231
        %v234 = vmul.f32 %v225, %v232
        %236 = vset.pattern.permute.xlu0 0
        %237 = vperm.xlu0 %236, %v227
        %v238 = vpop.permute.xlu0 %237
        %v240 = vadd.f32 %v234, %v238
        %v241 = vlaneseq
        %v242 = vand.u32 %v241, 127
        %243 = vrot.lane.b32.xlu0 %v225, 1
        %v244 = vpop.permute.xlu0 %243
        %vm245 = vcmp.ge.s32.totalorder %v242, 1
        %v246 = vsel %vm245, %v244, 0.0
        %248 = vset.pattern.permute.xlu0 0
        %249 = vperm.xlu0 %248, %v226
        %v250 = vpop.permute.xlu0 %249
        %v252 = vmul.f32 %v246, %v250
        %v253 = vadd.f32 %v240, %v252
        %254 = vrot.lane.b32.xlu0 %v225, 127
        %v255 = vpop.permute.xlu0 %254
        %vm256 = vcmp.lt.s32.totalorder %v242, 127
        %v257 = vsel %vm256, %v255, 0.0
        %258 = vset.pattern.permute.xlu0 2
        %259 = vperm.xlu0 %258, %v226
        %v260 = vpop.permute.xlu0 %259
        %v262 = vmul.f32 %v257, %v260
        %v263 = vadd.f32 %v253, %v262
        %264 = vst [vmem:[%s209] sm:$0xff] %v263
        %s265 = sand.u32 %s119, 1
        %s266 = scalar_lea.sflag [#allocation3], %s265
        %s267 = sand.u32 %s119, 1
        %s268 = smul.addr %s267, 8
        %s269 = scalar_lea.vmem [#allocation2], %s268
        // Predicated region
        $region33: #{tpu_custom_call.1} parent=31 // pred_check
          %p270 = pneg %p129
        $region34: #{tpu_custom_call.1} parent=31 // pred_check_branch
          %272 = sbr.rel (%p270) target = $region36
        $region35: #{tpu_custom_call.1} parent=31 // pred_region
          %s274 = ssub.s32 128, 128
          %275 = vsyncadd %s266, %s274
          %s276 = sadd.s32 %s21, %s22
          %s277 = smul.addr %s276, 128
          %s278 = scalar_lea.hbm %s3, %s277
          %s280 = sshll.u32 %s269, 4
          %s281 = int_to_ptr.vmem [resolvable:$true] %s280
          %283 = dma.vmem_to_hbm [thread:$0]  %s281, 128, %s278, %s266
        $region36: #{tpu_custom_call.1} parent=31 // pred_fallthru
          _
      $region32: #{tpu_custom_call.1} parent=5 // pred_fallthru
        _
      %p284 = scmp.le.s32.totalorder 2, %s12
      // Predicated region
      $region37: #{tpu_custom_call.1} parent=5 // pred_check
        %p285 = pneg %p284
      $region38: #{tpu_custom_call.1} parent=5 // pred_check_branch
        %287 = sbr.rel (%p285) target = $region40
      $region39: #{tpu_custom_call.1} parent=5 // pred_region
        %s288 = ssub.s32 %s12, 2
        // Predicated region
        $region41: #{tpu_custom_call.1} parent=39 // pred_check
          %p289 = pneg %p135
        $region42: #{tpu_custom_call.1} parent=39 // pred_check_branch
          %291 = sbr.rel (%p289) target = $region44
        $region43: #{tpu_custom_call.1} parent=39 // pred_region
          %s292 = sand.u32 %s120, 1
          %s293 = scalar_lea.sflag [#allocation3], %s292
          %s294 = sand.u32 %s120, 1
          %s295 = smul.addr %s294, 8
          %s296 = scalar_lea.vmem [#allocation2], %s295
          %297 = dma.done %s293, 128
        $region44: #{tpu_custom_call.1} parent=39 // pred_fallthru
          _
      $region40: #{tpu_custom_call.1} parent=5 // pred_fallthru
        _
    $region6: #{tpu_custom_call.1} parent=1 // loop_footer
      %s16 = sadd.s32 1, %s12
    $region7: #{tpu_custom_call.1} parent=1 // loop_footer_branch
      %11 = sbr.rel target = $region3
    $region8: #{tpu_custom_call.1} parent=1 // loop_exit
      _
    %298 = vsyncpa [#allocation3], 1
    %s299 = scalar_lea.sflag [#allocation3], 1
    %300 = vsyncpa %s299, 1

</llo_original>
